<compile_context>
chip_gen: v5e
topology: v5e:2x2
jax: 0.10.0
libtpu: 0.0.40
codegen_flags: <defaults>
</compile_context>

<pallas_src>
import functools

import jax
import jax.numpy as jnp
import numpy as np
from jax import lax
from jax.experimental import pallas as pl
from jax.experimental.pallas import tpu as pltpu


def _nonlin(name):
    if name == "tanh":
        return jnp.tanh
    elif name == "relu":
        return lambda v: jnp.maximum(v, 0.0)
    raise ValueError(f"unsupported nonlinearity: {name}")


def _round_up(n, m):
    return ((n + m - 1) // m) * m


def _choose_time_chunk(T, cap=64):
    """Largest divisor of T that is <= cap (per-step code is tiny, so big chunks win)."""
    cap = max(1, min(cap, T))
    for c in range(cap, 0, -1):
        if T % c == 0:
            return c
    return 1


def rnn_kernel(x_ref,          # (Tc, Bp, Ip)   raw input chunk (time-major, padded)
               wih1_ref,       # (Ip, H1p)      W_ih1^T (padded)
               b1_ref,         # (1, H1p)       b_ih1 + b_hh1 (padded)
               whh1_ref,       # (H1p, H1p)     W_hh1^T (padded)
               w2_ref,         # (H1p+H2p, H2p) stacked [W_ih2^T ; W_hh2^T] (padded)
               b2_ref,         # (1, H2p)       b_ih2 + b_hh2 (padded)
               wfc_ref,        # (H2p, Op)      W_fc^T (padded)
               bfc_ref,        # (1, Op)        b_fc (padded)
               out_ref,        # (Bp, Op)
               state_scr,      # (Bp, H1p+H2p)  [:, :H1p] = h1, [:, H1p:] = h2
               xp_scr,         # (Tc, Bp, H1p)  staged layer-1 input projection
               *, nonlinearity, tc, bp, h1p, h2p):
    act = _nonlin(nonlinearity)
    c = pl.program_id(0)

    # Zero initial hidden states (matches the explicit zero h0 in the PyTorch module).
    @pl.when(c == 0)
    def _():
        state_scr[...] = jnp.zeros_like(state_scr)

    # Chunk-wide layer-1 input projection: one big MXU op, off the recurrent dependency
    # chain.  Both layer-1 biases are folded in here.  Staged in VMEM; the per-step
    # reads below are not loop-carried.
    xc = x_ref[...].reshape(tc * bp, -1)                         # (Tc*Bp, Ip)
    proj = jnp.dot(xc, wih1_ref[...], preferred_element_type=jnp.float32)
    xp_scr[...] = proj.reshape(tc, bp, h1p) + b1_ref[...]

    # Hoist constant operands out of the unrolled loop (no per-step re-loads or
    # re-materialized broadcasts).
    whh1 = whh1_ref[...]
    w2 = w2_ref[...]
    b2 = jnp.broadcast_to(b2_ref[...], (bp, h2p))

    # Recurrent state lives in registers for the whole chunk; the VMEM scratch is only
    # touched once here (load) and once at the end (store) for cross-chunk persistence.
    h1_in = state_scr[:, :h1p]
    h2_in = state_scr[:, h1p:]

    def step(t, carry):
        h1, h2 = carry
        # Layer 1: h1_t = act(x_t @ W_ih1^T + b1 + h1_{t-1} @ W_hh1^T)
        h1 = act(xp_scr[t] + jnp.dot(h1, whh1, preferred_element_type=jnp.float32))
        # Layer 2 (fused): h2_t = act([h1_t | h2_{t-1}] @ [W_ih2^T ; W_hh2^T] + b2)
        h12 = jnp.concatenate([h1, h2], axis=-1)    # lane-aligned register concat
        h2 = act(jnp.dot(h12, w2, preferred_element_type=jnp.float32) + b2)
        return (h1, h2)

    h1_f, h2_f = lax.fori_loop(0, tc, step, (h1_in, h2_in), unroll=True)

    state_scr[:, :h1p] = h1_f
    state_scr[:, h1p:] = h2_f

    # fc applied only to the final timestep's layer-2 hidden state (register-resident).
    @pl.when(c == pl.num_programs(0) - 1)
    def _():
        out_ref[...] = (
            jnp.dot(h2_f, wfc_ref[...], preferred_element_type=jnp.float32)
            + bfc_ref[...]
        ).astype(out_ref.dtype)


def custom_rnn_forward(x, params, *, nonlinearity="tanh", time_chunk=None):
    """x: (B, T, input_size) float32. Returns (B, output_size)."""
    B, T, I = x.shape
    H1 = params["w_ih1"].shape[0]
    H2 = params["w_ih2"].shape[0]
    O = params["w_fc"].shape[0]

    Bp = _round_up(B, 8)
    Ip = _round_up(I, 128)
    H1p = _round_up(H1, 128)
    H2p = _round_up(H2, 128)
    Op = _round_up(O, 128)

    f32 = jnp.float32

    # Raw input, time-major and padded; the projection itself happens in the kernel.
    xt = jnp.transpose(x.astype(f32), (1, 0, 2))                 # (T, B, I)
    xt = jnp.pad(xt, ((0, 0), (0, Bp - B), (0, Ip - I)))         # (T, Bp, Ip)

    # Weights / biases, pre-transposed and zero-padded to tile shapes.
    wih1 = jnp.pad(params["w_ih1"].T.astype(f32),
                   ((0, Ip - I), (0, H1p - H1)))                 # (Ip, H1p)
    b1 = jnp.pad((params["b_ih1"] + params["b_hh1"]).astype(f32).reshape(1, H1),
                 ((0, 0), (0, H1p - H1)))                        # (1, H1p)
    whh1 = jnp.pad(params["w_hh1"].T.astype(f32),
                   ((0, H1p - H1), (0, H1p - H1)))               # (H1p, H1p)
    w_ih2_t = jnp.pad(params["w_ih2"].T.astype(f32),
                      ((0, H1p - H1), (0, H2p - H2)))            # (H1p, H2p)
    w_hh2_t = jnp.pad(params["w_hh2"].T.astype(f32),
                      ((0, H2p - H2), (0, H2p - H2)))            # (H2p, H2p)
    w2 = jnp.concatenate([w_ih2_t, w_hh2_t], axis=0)             # (H1p+H2p, H2p)
    b2 = jnp.pad((params["b_ih2"] + params["b_hh2"]).astype(f32).reshape(1, H2),
                 ((0, 0), (0, H2p - H2)))                        # (1, H2p)
    wfc = jnp.pad(params["w_fc"].T.astype(f32),
                  ((0, H2p - H2), (0, Op - O)))                  # (H2p, Op)
    bfc = jnp.pad(params["b_fc"].astype(f32).reshape(1, O),
                  ((0, 0), (0, Op - O)))                         # (1, Op)

    if time_chunk is not None and T % time_chunk == 0:
        tc = time_chunk
    else:
        tc = _choose_time_chunk(T)
    n_chunks = T // tc

    # Weights/biases never change across grid steps (constant index_map), so the
    # pipeline keeps them resident and does not re-DMA them.
    full = lambda shape: pl.BlockSpec(shape, lambda c: tuple(0 for _ in shape))

    grid_spec = pltpu.PrefetchScalarGridSpec(
        num_scalar_prefetch=0,
        grid=(n_chunks,),
        in_specs=[
            pl.BlockSpec((tc, Bp, Ip), lambda c: (c, 0, 0)),     # raw input chunk
            full((Ip, H1p)), full((1, H1p)),                     # layer-1 input proj
            full((H1p, H1p)),                                    # W_hh1^T
            full((H1p + H2p, H2p)), full((1, H2p)),              # stacked layer-2 W, b
            full((H2p, Op)), full((1, Op)),                      # fc
        ],
        out_specs=pl.BlockSpec((Bp, Op), lambda c: (0, 0)),
        scratch_shapes=[
            pltpu.VMEM((Bp, H1p + H2p), jnp.float32),            # persistent [h1|h2]
            pltpu.VMEM((tc, Bp, H1p), jnp.float32),              # staged x projection
        ],
    )

    kernel = functools.partial(rnn_kernel, nonlinearity=nonlinearity,
                               tc=tc, bp=Bp, h1p=H1p, h2p=H2p)
    out_padded = pl.pallas_call(
        kernel,
        out_shape=jax.ShapeDtypeStruct((Bp, Op), jnp.float32),
        grid_spec=grid_spec,
        compiler_params=pltpu.CompilerParams(
            dimension_semantics=("arbitrary",)),   # recurrence is sequential in time
    )(xt, wih1, b1, whh1, w2, b2, wfc, bfc)

    return out_padded[:B, :O]


def make_params(key, input_size, h1, h2, out_size):
    """Deterministic PyTorch-style uniform(-1/sqrt(H), 1/sqrt(H)) init."""
    ks = jax.random.split(key, 10)
    u = lambda k, shape, bound: jax.random.uniform(
        k, shape, jnp.float32, minval=-bound, maxval=bound)
    b1 = 1.0 / np.sqrt(h1)
    b2 = 1.0 / np.sqrt(h2)
    return dict(
        w_ih1=u(ks[0], (h1, input_size), b1), w_hh1=u(ks[1], (h1, h1), b1),
        b_ih1=u(ks[2], (h1,), b1), b_hh1=u(ks[3], (h1,), b1),
        w_ih2=u(ks[4], (h2, h1), b2), w_hh2=u(ks[5], (h2, h2), b2),
        b_ih2=u(ks[6], (h2,), b2), b_hh2=u(ks[7], (h2,), b2),
        w_fc=u(ks[8], (out_size, h2), b2), b_fc=u(ks[9], (out_size,), b2),
    )


def reference_forward_np(x, p, nonlinearity="tanh"):
    """Pure-numpy f32 reference matching the PyTorch forward."""
    x = np.asarray(x, np.float32)
    pn = {k: np.asarray(v, np.float32) for k, v in p.items()}
    act = np.tanh if nonlinearity == "tanh" else (lambda v: np.maximum(v, 0.0))
    B, T, _ = x.shape
    h1 = np.zeros((B, pn["w_ih1"].shape[0]), np.float32)
    h2 = np.zeros((B, pn["w_ih2"].shape[0]), np.float32)
    for t in range(T):
        xt = x[:, t, :]
        h1 = act(xt @ pn["w_ih1"].T + pn["b_ih1"] + h1 @ pn["w_hh1"].T + pn["b_hh1"])
        h2 = act(h1 @ pn["w_ih2"].T + pn["b_ih2"] + h2 @ pn["w_hh2"].T + pn["b_hh2"])
    return h2 @ pn["w_fc"].T + pn["b_fc"]


if __name__ == "__main__":
    B, T = 2, 8
    input_size, hidden1, hidden2, output_size = 16, 32, 32, 8
    nonlinearity = "tanh"

    key = jax.random.PRNGKey(0)
    kx, kp = jax.random.split(key)
    x = jax.random.normal(kx, (B, T, input_size), jnp.float32)
    params = make_params(kp, input_size, hidden1, hidden2, output_size)

    out = custom_rnn_forward(x, params, nonlinearity=nonlinearity)
    out = jax.block_until_ready(out)

    ref = reference_forward_np(x, params, nonlinearity)
    np.testing.assert_allclose(np.asarray(out), ref, rtol=1e-4, atol=1e-4)

    print("KERNEL_OK")
</pallas_src>

<mosaic_0001>
module attributes {stable_mosaic.version = 11 : i64} {
  func.func @rnn_kernel(%arg0: i32, %arg1: memref<8x8x128xf32, #tpu.memory_space<vmem>>, %arg2: memref<128x128xf32, #tpu.memory_space<vmem>>, %arg3: memref<1x128xf32, #tpu.memory_space<vmem>>, %arg4: memref<128x128xf32, #tpu.memory_space<vmem>>, %arg5: memref<256x128xf32, #tpu.memory_space<vmem>>, %arg6: memref<1x128xf32, #tpu.memory_space<vmem>>, %arg7: memref<128x128xf32, #tpu.memory_space<vmem>>, %arg8: memref<1x128xf32, #tpu.memory_space<vmem>>, %arg9: memref<8x128xf32, #tpu.memory_space<vmem>>, %arg10: memref<8x256xf32, #tpu.memory_space<vmem>>, %arg11: memref<8x8x128xf32, #tpu.memory_space<vmem>>) attributes {dimension_semantics = [#tpu.dimension_semantics<arbitrary>], iteration_bounds = array<i64: 1>, scalar_prefetch = 0 : i64, scratch_operands = 2 : i64, tpu.core_type = #tpu.core_type<tc>, window_params = [{transform_indices = @transform_0, window_bounds = array<i64: 8, 8, 128>}, {pipeline_mode = #tpu.pipeline_mode<synchronous>, transform_indices = @transform_1, window_bounds = array<i64: 128, 128>}, {pipeline_mode = #tpu.pipeline_mode<synchronous>, transform_indices = @transform_2, window_bounds = array<i64: 1, 128>}, {pipeline_mode = #tpu.pipeline_mode<synchronous>, transform_indices = @transform_3, window_bounds = array<i64: 128, 128>}, {pipeline_mode = #tpu.pipeline_mode<synchronous>, transform_indices = @transform_4, window_bounds = array<i64: 256, 128>}, {pipeline_mode = #tpu.pipeline_mode<synchronous>, transform_indices = @transform_5, window_bounds = array<i64: 1, 128>}, {pipeline_mode = #tpu.pipeline_mode<synchronous>, transform_indices = @transform_6, window_bounds = array<i64: 128, 128>}, {pipeline_mode = #tpu.pipeline_mode<synchronous>, transform_indices = @transform_7, window_bounds = array<i64: 1, 128>}, {pipeline_mode = #tpu.pipeline_mode<synchronous>, transform_indices = @transform_8, window_bounds = array<i64: 8, 128>}]} {
    %c0_i32 = arith.constant 0 : i32
    %0 = arith.cmpi eq, %arg0, %c0_i32 : i32
    %1 = arith.extui %0 : i1 to i32
    %c0_i32_0 = arith.constant 0 : i32
    %2 = arith.cmpi ne, %1, %c0_i32_0 : i32
    scf.if %2 {
      %cst_58 = arith.constant 0.000000e+00 : f32
      %105 = vector.broadcast %cst_58 : f32 to vector<8x256xf32>
      %c0_59 = arith.constant 0 : index
      %c0_60 = arith.constant 0 : index
      %106 = vector.load %arg10[%c0_59, %c0_60] : memref<8x256xf32, #tpu.memory_space<vmem>>, vector<8x256xf32>
      tpu.vector_store %arg10[%c0_59, %c0_60], %105 {strides = array<i32>} : memref<8x256xf32, #tpu.memory_space<vmem>>, vector<8x256xf32>,
    } else {
    }
    %c0 = arith.constant 0 : index
    %c0_1 = arith.constant 0 : index
    %c0_2 = arith.constant 0 : index
    %3 = vector.load %arg1[%c0, %c0_1, %c0_2] : memref<8x8x128xf32, #tpu.memory_space<vmem>>, vector<8x8x128xf32>
    %4 = vector.shape_cast %3 : vector<8x8x128xf32> to vector<64x128xf32>
    %c0_3 = arith.constant 0 : index
    %c0_4 = arith.constant 0 : index
    %5 = vector.load %arg2[%c0_3, %c0_4] : memref<128x128xf32, #tpu.memory_space<vmem>>, vector<128x128xf32>
    %cst = arith.constant dense<0.000000e+00> : vector<64x128xf32>
    %6 = tpu.matmul %4, %5, %cst {dimension_numbers = #tpu.dot_dimension_numbers<[1], [0], [0], [1], [0, 0, 1, 1], [], []>} : vector<64x128xf32>, vector<128x128xf32>, vector<64x128xf32> -> vector<64x128xf32>
    %7 = vector.shape_cast %6 : vector<64x128xf32> to vector<8x8x128xf32>
    %c0_5 = arith.constant 0 : index
    %c0_6 = arith.constant 0 : index
    %8 = vector.load %arg3[%c0_5, %c0_6] : memref<1x128xf32, #tpu.memory_space<vmem>>, vector<1x128xf32>
    %9 = vector.shape_cast %8 : vector<1x128xf32> to vector<1x1x128xf32>
    %10 = vector.broadcast %9 : vector<1x1x128xf32> to vector<8x8x128xf32>
    %11 = arith.addf %7, %10 : vector<8x8x128xf32>
    %c0_7 = arith.constant 0 : index
    %c0_8 = arith.constant 0 : index
    %c0_9 = arith.constant 0 : index
    %12 = vector.load %arg11[%c0_7, %c0_8, %c0_9] : memref<8x8x128xf32, #tpu.memory_space<vmem>>, vector<8x8x128xf32>
    tpu.vector_store %arg11[%c0_7, %c0_8, %c0_9], %11 {strides = array<i32>} : memref<8x8x128xf32, #tpu.memory_space<vmem>>, vector<8x8x128xf32>,
    %c0_10 = arith.constant 0 : index
    %c0_11 = arith.constant 0 : index
    %13 = vector.load %arg4[%c0_10, %c0_11] : memref<128x128xf32, #tpu.memory_space<vmem>>, vector<128x128xf32>
    %c0_12 = arith.constant 0 : index
    %c0_13 = arith.constant 0 : index
    %14 = vector.load %arg5[%c0_12, %c0_13] : memref<256x128xf32, #tpu.memory_space<vmem>>, vector<256x128xf32>
    %c0_14 = arith.constant 0 : index
    %c0_15 = arith.constant 0 : index
    %15 = vector.load %arg6[%c0_14, %c0_15] : memref<1x128xf32, #tpu.memory_space<vmem>>, vector<1x128xf32>
    %16 = vector.shape_cast %15 : vector<1x128xf32> to vector<1x128xf32>
    %17 = vector.broadcast %16 : vector<1x128xf32> to vector<8x128xf32>
    %c0_16 = arith.constant 0 : index
    %c0_17 = arith.constant 0 : index
    %18 = vector.load %arg10[%c0_16, %c0_17] : memref<8x256xf32, #tpu.memory_space<vmem>>, vector<8x128xf32>
    %c0_18 = arith.constant 0 : index
    %c128 = arith.constant 128 : index
    %19 = vector.load %arg10[%c0_18, %c128] : memref<8x256xf32, #tpu.memory_space<vmem>>, vector<8x128xf32>
    %c0_i32_19 = arith.constant 0 : i32
    %20 = arith.index_cast %c0_i32_19 : i32 to index
    %c0_20 = arith.constant 0 : index
    %c0_21 = arith.constant 0 : index
    %21 = vector.load %arg11[%20, %c0_20, %c0_21] : memref<8x8x128xf32, #tpu.memory_space<vmem>>, vector<1x8x128xf32>
    %22 = vector.shape_cast %21 : vector<1x8x128xf32> to vector<8x128xf32>
    %cst_22 = arith.constant dense<0.000000e+00> : vector<8x128xf32>
    %23 = tpu.matmul %18, %13, %cst_22 {dimension_numbers = #tpu.dot_dimension_numbers<[1], [0], [0], [1], [0, 0, 1, 1], [], []>} : vector<8x128xf32>, vector<128x128xf32>, vector<8x128xf32> -> vector<8x128xf32>
    %24 = arith.addf %22, %23 : vector<8x128xf32>
    %25 = math.tanh %24 : vector<8x128xf32>
    %26 = tpu.concatenate %25, %19 in 1 : vector<8x128xf32>, vector<8x128xf32> -> vector<8x256xf32>
    %cst_23 = arith.constant dense<0.000000e+00> : vector<8x128xf32>
    %27 = tpu.matmul %26, %14, %cst_23 {dimension_numbers = #tpu.dot_dimension_numbers<[1], [0], [0], [1], [0, 0, 1, 1], [], []>} : vector<8x256xf32>, vector<256x128xf32>, vector<8x128xf32> -> vector<8x128xf32>
    %28 = arith.addf %27, %17 : vector<8x128xf32>
    %29 = math.tanh %28 : vector<8x128xf32>
    %c1_i32 = arith.constant 1 : i32
    %30 = arith.index_cast %c1_i32 : i32 to index
    %c0_24 = arith.constant 0 : index
    %c0_25 = arith.constant 0 : index
    %31 = vector.load %arg11[%30, %c0_24, %c0_25] : memref<8x8x128xf32, #tpu.memory_space<vmem>>, vector<1x8x128xf32>
    %32 = vector.shape_cast %31 : vector<1x8x128xf32> to vector<8x128xf32>
    %cst_26 = arith.constant dense<0.000000e+00> : vector<8x128xf32>
    %33 = tpu.matmul %25, %13, %cst_26 {dimension_numbers = #tpu.dot_dimension_numbers<[1], [0], [0], [1], [0, 0, 1, 1], [], []>} : vector<8x128xf32>, vector<128x128xf32>, vector<8x128xf32> -> vector<8x128xf32>
    %34 = arith.addf %32, %33 : vector<8x128xf32>
    %35 = math.tanh %34 : vector<8x128xf32>
    %36 = tpu.concatenate %35, %29 in 1 : vector<8x128xf32>, vector<8x128xf32> -> vector<8x256xf32>
    %cst_27 = arith.constant dense<0.000000e+00> : vector<8x128xf32>
    %37 = tpu.matmul %36, %14, %cst_27 {dimension_numbers = #tpu.dot_dimension_numbers<[1], [0], [0], [1], [0, 0, 1, 1], [], []>} : vector<8x256xf32>, vector<256x128xf32>, vector<8x128xf32> -> vector<8x128xf32>
    %38 = arith.addf %37, %17 : vector<8x128xf32>
    %39 = math.tanh %38 : vector<8x128xf32>
    %c2_i32 = arith.constant 2 : i32
    %40 = arith.index_cast %c2_i32 : i32 to index
    %c0_28 = arith.constant 0 : index
    %c0_29 = arith.constant 0 : index
    %41 = vector.load %arg11[%40, %c0_28, %c0_29] : memref<8x8x128xf32, #tpu.memory_space<vmem>>, vector<1x8x128xf32>
    %42 = vector.shape_cast %41 : vector<1x8x128xf32> to vector<8x128xf32>
    %cst_30 = arith.constant dense<0.000000e+00> : vector<8x128xf32>
    %43 = tpu.matmul %35, %13, %cst_30 {dimension_numbers = #tpu.dot_dimension_numbers<[1], [0], [0], [1], [0, 0, 1, 1], [], []>} : vector<8x128xf32>, vector<128x128xf32>, vector<8x128xf32> -> vector<8x128xf32>
    %44 = arith.addf %42, %43 : vector<8x128xf32>
    %45 = math.tanh %44 : vector<8x128xf32>
    %46 = tpu.concatenate %45, %39 in 1 : vector<8x128xf32>, vector<8x128xf32> -> vector<8x256xf32>
    %cst_31 = arith.constant dense<0.000000e+00> : vector<8x128xf32>
    %47 = tpu.matmul %46, %14, %cst_31 {dimension_numbers = #tpu.dot_dimension_numbers<[1], [0], [0], [1], [0, 0, 1, 1], [], []>} : vector<8x256xf32>, vector<256x128xf32>, vector<8x128xf32> -> vector<8x128xf32>
    %48 = arith.addf %47, %17 : vector<8x128xf32>
    %49 = math.tanh %48 : vector<8x128xf32>
    %c3_i32 = arith.constant 3 : i32
    %50 = arith.index_cast %c3_i32 : i32 to index
    %c0_32 = arith.constant 0 : index
    %c0_33 = arith.constant 0 : index
    %51 = vector.load %arg11[%50, %c0_32, %c0_33] : memref<8x8x128xf32, #tpu.memory_space<vmem>>, vector<1x8x128xf32>
    %52 = vector.shape_cast %51 : vector<1x8x128xf32> to vector<8x128xf32>
    %cst_34 = arith.constant dense<0.000000e+00> : vector<8x128xf32>
    %53 = tpu.matmul %45, %13, %cst_34 {dimension_numbers = #tpu.dot_dimension_numbers<[1], [0], [0], [1], [0, 0, 1, 1], [], []>} : vector<8x128xf32>, vector<128x128xf32>, vector<8x128xf32> -> vector<8x128xf32>
    %54 = arith.addf %52, %53 : vector<8x128xf32>
    %55 = math.tanh %54 : vector<8x128xf32>
    %56 = tpu.concatenate %55, %49 in 1 : vector<8x128xf32>, vector<8x128xf32> -> vector<8x256xf32>
    %cst_35 = arith.constant dense<0.000000e+00> : vector<8x128xf32>
    %57 = tpu.matmul %56, %14, %cst_35 {dimension_numbers = #tpu.dot_dimension_numbers<[1], [0], [0], [1], [0, 0, 1, 1], [], []>} : vector<8x256xf32>, vector<256x128xf32>, vector<8x128xf32> -> vector<8x128xf32>
    %58 = arith.addf %57, %17 : vector<8x128xf32>
    %59 = math.tanh %58 : vector<8x128xf32>
    %c4_i32 = arith.constant 4 : i32
    %60 = arith.index_cast %c4_i32 : i32 to index
    %c0_36 = arith.constant 0 : index
    %c0_37 = arith.constant 0 : index
    %61 = vector.load %arg11[%60, %c0_36, %c0_37] : memref<8x8x128xf32, #tpu.memory_space<vmem>>, vector<1x8x128xf32>
    %62 = vector.shape_cast %61 : vector<1x8x128xf32> to vector<8x128xf32>
    %cst_38 = arith.constant dense<0.000000e+00> : vector<8x128xf32>
    %63 = tpu.matmul %55, %13, %cst_38 {dimension_numbers = #tpu.dot_dimension_numbers<[1], [0], [0], [1], [0, 0, 1, 1], [], []>} : vector<8x128xf32>, vector<128x128xf32>, vector<8x128xf32> -> vector<8x128xf32>
    %64 = arith.addf %62, %63 : vector<8x128xf32>
    %65 = math.tanh %64 : vector<8x128xf32>
    %66 = tpu.concatenate %65, %59 in 1 : vector<8x128xf32>, vector<8x128xf32> -> vector<8x256xf32>
    %cst_39 = arith.constant dense<0.000000e+00> : vector<8x128xf32>
    %67 = tpu.matmul %66, %14, %cst_39 {dimension_numbers = #tpu.dot_dimension_numbers<[1], [0], [0], [1], [0, 0, 1, 1], [], []>} : vector<8x256xf32>, vector<256x128xf32>, vector<8x128xf32> -> vector<8x128xf32>
    %68 = arith.addf %67, %17 : vector<8x128xf32>
    %69 = math.tanh %68 : vector<8x128xf32>
    %c5_i32 = arith.constant 5 : i32
    %70 = arith.index_cast %c5_i32 : i32 to index
    %c0_40 = arith.constant 0 : index
    %c0_41 = arith.constant 0 : index
    %71 = vector.load %arg11[%70, %c0_40, %c0_41] : memref<8x8x128xf32, #tpu.memory_space<vmem>>, vector<1x8x128xf32>
    %72 = vector.shape_cast %71 : vector<1x8x128xf32> to vector<8x128xf32>
    %cst_42 = arith.constant dense<0.000000e+00> : vector<8x128xf32>
    %73 = tpu.matmul %65, %13, %cst_42 {dimension_numbers = #tpu.dot_dimension_numbers<[1], [0], [0], [1], [0, 0, 1, 1], [], []>} : vector<8x128xf32>, vector<128x128xf32>, vector<8x128xf32> -> vector<8x128xf32>
    %74 = arith.addf %72, %73 : vector<8x128xf32>
    %75 = math.tanh %74 : vector<8x128xf32>
    %76 = tpu.concatenate %75, %69 in 1 : vector<8x128xf32>, vector<8x128xf32> -> vector<8x256xf32>
    %cst_43 = arith.constant dense<0.000000e+00> : vector<8x128xf32>
    %77 = tpu.matmul %76, %14, %cst_43 {dimension_numbers = #tpu.dot_dimension_numbers<[1], [0], [0], [1], [0, 0, 1, 1], [], []>} : vector<8x256xf32>, vector<256x128xf32>, vector<8x128xf32> -> vector<8x128xf32>
    %78 = arith.addf %77, %17 : vector<8x128xf32>
    %79 = math.tanh %78 : vector<8x128xf32>
    %c6_i32 = arith.constant 6 : i32
    %80 = arith.index_cast %c6_i32 : i32 to index
    %c0_44 = arith.constant 0 : index
    %c0_45 = arith.constant 0 : index
    %81 = vector.load %arg11[%80, %c0_44, %c0_45] : memref<8x8x128xf32, #tpu.memory_space<vmem>>, vector<1x8x128xf32>
    %82 = vector.shape_cast %81 : vector<1x8x128xf32> to vector<8x128xf32>
    %cst_46 = arith.constant dense<0.000000e+00> : vector<8x128xf32>
    %83 = tpu.matmul %75, %13, %cst_46 {dimension_numbers = #tpu.dot_dimension_numbers<[1], [0], [0], [1], [0, 0, 1, 1], [], []>} : vector<8x128xf32>, vector<128x128xf32>, vector<8x128xf32> -> vector<8x128xf32>
    %84 = arith.addf %82, %83 : vector<8x128xf32>
    %85 = math.tanh %84 : vector<8x128xf32>
    %86 = tpu.concatenate %85, %79 in 1 : vector<8x128xf32>, vector<8x128xf32> -> vector<8x256xf32>
    %cst_47 = arith.constant dense<0.000000e+00> : vector<8x128xf32>
    %87 = tpu.matmul %86, %14, %cst_47 {dimension_numbers = #tpu.dot_dimension_numbers<[1], [0], [0], [1], [0, 0, 1, 1], [], []>} : vector<8x256xf32>, vector<256x128xf32>, vector<8x128xf32> -> vector<8x128xf32>
    %88 = arith.addf %87, %17 : vector<8x128xf32>
    %89 = math.tanh %88 : vector<8x128xf32>
    %c7_i32 = arith.constant 7 : i32
    %90 = arith.index_cast %c7_i32 : i32 to index
    %c0_48 = arith.constant 0 : index
    %c0_49 = arith.constant 0 : index
    %91 = vector.load %arg11[%90, %c0_48, %c0_49] : memref<8x8x128xf32, #tpu.memory_space<vmem>>, vector<1x8x128xf32>
    %92 = vector.shape_cast %91 : vector<1x8x128xf32> to vector<8x128xf32>
    %cst_50 = arith.constant dense<0.000000e+00> : vector<8x128xf32>
    %93 = tpu.matmul %85, %13, %cst_50 {dimension_numbers = #tpu.dot_dimension_numbers<[1], [0], [0], [1], [0, 0, 1, 1], [], []>} : vector<8x128xf32>, vector<128x128xf32>, vector<8x128xf32> -> vector<8x128xf32>
    %94 = arith.addf %92, %93 : vector<8x128xf32>
    %95 = math.tanh %94 : vector<8x128xf32>
    %96 = tpu.concatenate %95, %89 in 1 : vector<8x128xf32>, vector<8x128xf32> -> vector<8x256xf32>
    %cst_51 = arith.constant dense<0.000000e+00> : vector<8x128xf32>
    %97 = tpu.matmul %96, %14, %cst_51 {dimension_numbers = #tpu.dot_dimension_numbers<[1], [0], [0], [1], [0, 0, 1, 1], [], []>} : vector<8x256xf32>, vector<256x128xf32>, vector<8x128xf32> -> vector<8x128xf32>
    %98 = arith.addf %97, %17 : vector<8x128xf32>
    %99 = math.tanh %98 : vector<8x128xf32>
    %c8_i32 = arith.constant 8 : i32
    %c0_52 = arith.constant 0 : index
    %c0_53 = arith.constant 0 : index
    %100 = vector.load %arg10[%c0_52, %c0_53] : memref<8x256xf32, #tpu.memory_space<vmem>>, vector<8x128xf32>
    tpu.vector_store %arg10[%c0_52, %c0_53], %95 {strides = array<i32>} : memref<8x256xf32, #tpu.memory_space<vmem>>, vector<8x128xf32>,
    %c0_54 = arith.constant 0 : index
    %c128_55 = arith.constant 128 : index
    %101 = vector.load %arg10[%c0_54, %c128_55] : memref<8x256xf32, #tpu.memory_space<vmem>>, vector<8x128xf32>
    tpu.vector_store %arg10[%c0_54, %c128_55], %99 {strides = array<i32>} : memref<8x256xf32, #tpu.memory_space<vmem>>, vector<8x128xf32>,
    %c0_i32_56 = arith.constant 0 : i32
    %102 = arith.cmpi eq, %arg0, %c0_i32_56 : i32
    %103 = arith.extui %102 : i1 to i32
    %c0_i32_57 = arith.constant 0 : i32
    %104 = arith.cmpi ne, %103, %c0_i32_57 : i32
    scf.if %104 {
      %c0_58 = arith.constant 0 : index
      %c0_59 = arith.constant 0 : index
      %105 = vector.load %arg7[%c0_58, %c0_59] : memref<128x128xf32, #tpu.memory_space<vmem>>, vector<128x128xf32>
      %cst_60 = arith.constant dense<0.000000e+00> : vector<8x128xf32>
      %106 = tpu.matmul %99, %105, %cst_60 {dimension_numbers = #tpu.dot_dimension_numbers<[1], [0], [0], [1], [0, 0, 1, 1], [], []>} : vector<8x128xf32>, vector<128x128xf32>, vector<8x128xf32> -> vector<8x128xf32>
      %c0_61 = arith.constant 0 : index
      %c0_62 = arith.constant 0 : index
      %107 = vector.load %arg8[%c0_61, %c0_62] : memref<1x128xf32, #tpu.memory_space<vmem>>, vector<1x128xf32>
      %108 = vector.broadcast %107 : vector<1x128xf32> to vector<8x128xf32>
      %109 = arith.addf %106, %108 : vector<8x128xf32>
      %c0_63 = arith.constant 0 : index
      %c0_64 = arith.constant 0 : index
      %110 = vector.load %arg9[%c0_63, %c0_64] : memref<8x128xf32, #tpu.memory_space<vmem>>, vector<8x128xf32>
      tpu.vector_store %arg9[%c0_63, %c0_64], %109 {strides = array<i32>} : memref<8x128xf32, #tpu.memory_space<vmem>>, vector<8x128xf32>,
    } else {
    }
    return
  }
  func.func @transform_0(%arg0: i32) -> (i32, i32, i32) {
    %c0_i32 = arith.constant 0 : i32
    %c0_i32_0 = arith.constant 0 : i32
    %c0_i32_1 = arith.constant 0 : i32
    return %arg0, %c0_i32, %c0_i32_0 : i32, i32, i32
  }
  func.func @transform_1(%arg0: i32) -> (i32, i32) {
    %c0_i32 = arith.constant 0 : i32
    %c0_i32_0 = arith.constant 0 : i32
    %c0_i32_1 = arith.constant 0 : i32
    return %c0_i32, %c0_i32_0 : i32, i32
  }
  func.func @transform_2(%arg0: i32) -> (i32, i32) {
    %c0_i32 = arith.constant 0 : i32
    %c0_i32_0 = arith.constant 0 : i32
    %c0_i32_1 = arith.constant 0 : i32
    return %c0_i32, %c0_i32_0 : i32, i32
  }
  func.func @transform_3(%arg0: i32) -> (i32, i32) {
    %c0_i32 = arith.constant 0 : i32
    %c0_i32_0 = arith.constant 0 : i32
    %c0_i32_1 = arith.constant 0 : i32
    return %c0_i32, %c0_i32_0 : i32, i32
  }
  func.func @transform_4(%arg0: i32) -> (i32, i32) {
    %c0_i32 = arith.constant 0 : i32
    %c0_i32_0 = arith.constant 0 : i32
    %c0_i32_1 = arith.constant 0 : i32
    return %c0_i32, %c0_i32_0 : i32, i32
  }
  func.func @transform_5(%arg0: i32) -> (i32, i32) {
    %c0_i32 = arith.constant 0 : i32
    %c0_i32_0 = arith.constant 0 : i32
    %c0_i32_1 = arith.constant 0 : i32
    return %c0_i32, %c0_i32_0 : i32, i32
  }
  func.func @transform_6(%arg0: i32) -> (i32, i32) {
    %c0_i32 = arith.constant 0 : i32
    %c0_i32_0 = arith.constant 0 : i32
    %c0_i32_1 = arith.constant 0 : i32
    return %c0_i32, %c0_i32_0 : i32, i32
  }
  func.func @transform_7(%arg0: i32) -> (i32, i32) {
    %c0_i32 = arith.constant 0 : i32
    %c0_i32_0 = arith.constant 0 : i32
    %c0_i32_1 = arith.constant 0 : i32
    return %c0_i32, %c0_i32_0 : i32, i32
  }
  func.func @transform_8(%arg0: i32) -> (i32, i32) {
    %c0_i32 = arith.constant 0 : i32
    %c0_i32_0 = arith.constant 0 : i32
    %c0_i32_1 = arith.constant 0 : i32
    return %c0_i32, %c0_i32_0 : i32, i32
  }
}

</mosaic_0001>

<llo_original>
// kernel: tpu_custom_call.1
$region0: #{tpu_custom_call.1}
  #allocation0 [shape = 'u32[]', space=smem, size = 0x4, offset = 0x4, fixed_abs, tag = 'smem constant byte address 0x4 - core index']
  #allocation1 [shape = 'u32[72,128]{1,0:T(1,128)}', space=vmem, size = 0x9000, scoped, tag = 'internal scratch']
  #allocation2 [shape = 'f32[8,256]{1,0:T(8,128)}', space=vmem, size = 0x2000, scoped, tag = 'scratch operand']
  #allocation3 [shape = 'f32[8,8,128]{2,1,0:T(8,128)}', space=vmem, size = 0x8000, scoped, tag = 'scratch operand']
  %s0 = inlined_call_operand.hbm [shape: f32[8,8,128], index: 0, kind: input, shape index: {}]
  %s1 = inlined_call_operand.hbm [shape: f32[128,128], index: 1, kind: input, shape index: {}]
  %s2 = inlined_call_operand.vmem [shape: f32[1,128], index: 2, kind: input, shape index: {}]
  %s3 = inlined_call_operand.hbm [shape: f32[128,128], index: 3, kind: input, shape index: {}]
  %s4 = inlined_call_operand.hbm [shape: f32[256,128], index: 4, kind: input, shape index: {}]
  %s5 = inlined_call_operand.vmem [shape: f32[1,128], index: 5, kind: input, shape index: {}]
  %s6 = inlined_call_operand.hbm [shape: f32[128,128], index: 6, kind: input, shape index: {}]
  %s7 = inlined_call_operand.vmem [shape: f32[1,128], index: 7, kind: input, shape index: {}]
  %s8 = inlined_call_operand.hbm [shape: f32[8,128], index: 8, kind: output, shape index: {}]
  %s9 = sld [smem:[#allocation0]]
  $region70: #{tpu_custom_call.1} parent=0
    _
  %s11 = ssub.s32 1, %s9
  %s12 = scalar_select 0, %s11, %s9
  $region1: #{tpu_custom_call.1} parent=0
    #allocation4 [shape = 'u8[32768]{0}', space=vmem, size = 0x8000, scoped, tag = 'input window, operand 0, single buffered']
    #allocation5 [shape = 's32[1]{0}', space=sflag, size = 0x4, scoped, tag = 'scoped memory for tpu_custom_call.1']
    #allocation6 [shape = 's32[1]{0}', space=sflag, size = 0x4, scoped, tag = 'scoped memory for tpu_custom_call.1']
    #allocation7 [shape = 'u8[65536]{0}', space=vmem, size = 0x10000, scoped, tag = 'input window, operand 1, single buffered']
    #allocation8 [shape = 's32[1]{0}', space=sflag, size = 0x4, scoped, tag = 'scoped memory for tpu_custom_call.1']
    #allocation9 [shape = 'u8[65536]{0}', space=vmem, size = 0x10000, scoped, tag = 'input window, operand 3, single buffered']
    #allocation10 [shape = 'u8[131072]{0}', space=vmem, size = 0x20000, scoped, tag = 'input window, operand 4, single buffered']
    #allocation11 [shape = 's32[1]{0}', space=sflag, size = 0x4, scoped, tag = 'scoped memory for tpu_custom_call.1']
    #allocation12 [shape = 'u8[65536]{0}', space=vmem, size = 0x10000, scoped, tag = 'input window, operand 6, single buffered']
    #allocation13 [shape = 'u8[4096]{0}', space=vmem, size = 0x1000, scoped, tag = 'output window, operand 0, single buffered']
    %13 = vsyncpa [#allocation5], 0
    %14 = vsyncpa [#allocation8], 0
    %15 = vsyncpa [#allocation11], 0
    %16 = vsyncpa [#allocation6], 0
    // Predicated region
    $region2: #{tpu_custom_call.1} parent=1 // pred_check
      _
    $region3: #{tpu_custom_call.1} parent=1 // pred_check_branch
      %18 = sbr.rel (0) target = $region5
    $region4: #{tpu_custom_call.1} parent=1 // pred_region
      %20 = vsyncadd [#allocation5], 0
      %s21 = sshll.u32 %s0, 4
      %s22 = int_to_ptr.hbm [resolvable:$true] %s21
      %s23 = sshll.u32 [#allocation4], 4
      %s24 = int_to_ptr.vmem [resolvable:$true] %s23
      %29 = dma.hbm_to_vmem [thread:$0]  %s22, 1024, %s24, [#allocation5], 128, 128, 8
    $region5: #{tpu_custom_call.1} parent=1 // pred_fallthru
      _
    // Predicated region
    $region6: #{tpu_custom_call.1} parent=1 // pred_check
      _
    $region7: #{tpu_custom_call.1} parent=1 // pred_check_branch
      %31 = sbr.rel (0) target = $region9
    $region8: #{tpu_custom_call.1} parent=1 // pred_region
      %33 = vsyncadd [#allocation8], 0
      %s34 = sshll.u32 %s1, 4
      %s35 = int_to_ptr.hbm [resolvable:$true] %s34
      %s36 = sshll.u32 [#allocation7], 4
      %s37 = int_to_ptr.vmem [resolvable:$true] %s36
      %42 = dma.hbm_to_vmem [thread:$0]  %s35, 2048, %s37, [#allocation8], 128, 128, 8
    $region9: #{tpu_custom_call.1} parent=1 // pred_fallthru
      _
    // Predicated region
    $region10: #{tpu_custom_call.1} parent=1 // pred_check
      _
    $region11: #{tpu_custom_call.1} parent=1 // pred_check_branch
      %44 = sbr.rel (0) target = $region13
    $region12: #{tpu_custom_call.1} parent=1 // pred_region
      _
    $region13: #{tpu_custom_call.1} parent=1 // pred_fallthru
      _
    // Predicated region
    $region14: #{tpu_custom_call.1} parent=1 // pred_check
      _
    $region15: #{tpu_custom_call.1} parent=1 // pred_check_branch
      %46 = sbr.rel (0) target = $region17
    $region16: #{tpu_custom_call.1} parent=1 // pred_region
      %48 = vsyncadd [#allocation8], 0
      %s49 = sshll.u32 %s3, 4
      %s50 = int_to_ptr.hbm [resolvable:$true] %s49
      %s51 = sshll.u32 [#allocation9], 4
      %s52 = int_to_ptr.vmem [resolvable:$true] %s51
      %57 = dma.hbm_to_vmem [thread:$0]  %s50, 2048, %s52, [#allocation8], 128, 128, 8
    $region17: #{tpu_custom_call.1} parent=1 // pred_fallthru
      _
    // Predicated region
    $region18: #{tpu_custom_call.1} parent=1 // pred_check
      _
    $region19: #{tpu_custom_call.1} parent=1 // pred_check_branch
      %59 = sbr.rel (0) target = $region21
    $region20: #{tpu_custom_call.1} parent=1 // pred_region
      %61 = vsyncadd [#allocation11], 0
      %s62 = sshll.u32 %s4, 4
      %s63 = int_to_ptr.hbm [resolvable:$true] %s62
      %s64 = sshll.u32 [#allocation10], 4
      %s65 = int_to_ptr.vmem [resolvable:$true] %s64
      %70 = dma.hbm_to_vmem [thread:$0]  %s63, 4096, %s65, [#allocation11], 128, 128, 8
    $region21: #{tpu_custom_call.1} parent=1 // pred_fallthru
      _
    // Predicated region
    $region22: #{tpu_custom_call.1} parent=1 // pred_check
      _
    $region23: #{tpu_custom_call.1} parent=1 // pred_check_branch
      %72 = sbr.rel (0) target = $region25
    $region24: #{tpu_custom_call.1} parent=1 // pred_region
      _
    $region25: #{tpu_custom_call.1} parent=1 // pred_fallthru
      _
    // Predicated region
    $region26: #{tpu_custom_call.1} parent=1 // pred_check
      _
    $region27: #{tpu_custom_call.1} parent=1 // pred_check_branch
      %74 = sbr.rel (0) target = $region29
    $region28: #{tpu_custom_call.1} parent=1 // pred_region
      %76 = vsyncadd [#allocation11], 0
      %s77 = sshll.u32 %s6, 4
      %s78 = int_to_ptr.hbm [resolvable:$true] %s77
      %s79 = sshll.u32 [#allocation12], 4
      %s80 = int_to_ptr.vmem [resolvable:$true] %s79
      %85 = dma.hbm_to_vmem [thread:$0]  %s78, 2048, %s80, [#allocation11], 128, 128, 8
    $region29: #{tpu_custom_call.1} parent=1 // pred_fallthru
      _
    // Predicated region
    $region30: #{tpu_custom_call.1} parent=1 // pred_check
      _
    $region31: #{tpu_custom_call.1} parent=1 // pred_check_branch
      %87 = sbr.rel (0) target = $region33
    $region32: #{tpu_custom_call.1} parent=1 // pred_region
      _
    $region33: #{tpu_custom_call.1} parent=1 // pred_fallthru
      _
    // Predicated region
    $region34: #{tpu_custom_call.1} parent=1 // pred_check
      _
    $region35: #{tpu_custom_call.1} parent=1 // pred_check_branch
      %89 = sbr.rel (0) target = $region37
    $region36: #{tpu_custom_call.1} parent=1 // pred_region
      %91 = dma.done [#allocation5], 1024
    $region37: #{tpu_custom_call.1} parent=1 // pred_fallthru
      _
    // Predicated region
    $region38: #{tpu_custom_call.1} parent=1 // pred_check
      _
    $region39: #{tpu_custom_call.1} parent=1 // pred_check_branch
      %93 = sbr.rel (0) target = $region41
    $region40: #{tpu_custom_call.1} parent=1 // pred_region
      %95 = dma.done [#allocation8], 2048
    $region41: #{tpu_custom_call.1} parent=1 // pred_fallthru
      _
    // Predicated region
    $region42: #{tpu_custom_call.1} parent=1 // pred_check
      _
    $region43: #{tpu_custom_call.1} parent=1 // pred_check_branch
      %97 = sbr.rel (0) target = $region45
    $region44: #{tpu_custom_call.1} parent=1 // pred_region
      %99 = dma.done [#allocation8], 2048
    $region45: #{tpu_custom_call.1} parent=1 // pred_fallthru
      _
    // Predicated region
    $region46: #{tpu_custom_call.1} parent=1 // pred_check
      _
    $region47: #{tpu_custom_call.1} parent=1 // pred_check_branch
      %101 = sbr.rel (0) target = $region49
    $region48: #{tpu_custom_call.1} parent=1 // pred_region
      %103 = dma.done [#allocation11], 4096
    $region49: #{tpu_custom_call.1} parent=1 // pred_fallthru
      _
    // Predicated region
    $region50: #{tpu_custom_call.1} parent=1 // pred_check
      _
    $region51: #{tpu_custom_call.1} parent=1 // pred_check_branch
      %105 = sbr.rel (0) target = $region53
    $region52: #{tpu_custom_call.1} parent=1 // pred_region
      %107 = dma.done [#allocation11], 2048
    $region53: #{tpu_custom_call.1} parent=1 // pred_fallthru
      _
    %p108 = scmp.eq.s32.totalorder 0, 0
    // Predicated region
    $region54: #{tpu_custom_call.1} parent=1 // pred_check
      %p109 = pneg %p108
    $region55: #{tpu_custom_call.1} parent=1 // pred_check_branch
      %111 = sbr.rel (%p109) target = $region57
    $region56: #{tpu_custom_call.1} parent=1 // pred_region
      %112 = vst [vmem:[#allocation2] sm:$0xff] 0.0
      %113 = vst [vmem:[#allocation2 + $0x8] sm:$0xff] 0.0
    $region57: #{tpu_custom_call.1} parent=1 // pred_fallthru
      _
    %v114 = vld [vmem:[#allocation4] sm:$0xff]
    %v115 = vld [vmem:[#allocation4 + $0x8] sm:$0xff]
    %v116 = vld [vmem:[#allocation4 + $0x10] sm:$0xff]
    %v117 = vld [vmem:[#allocation4 + $0x18] sm:$0xff]
    %v118 = vld [vmem:[#allocation4 + $0x20] sm:$0xff]
    %v119 = vld [vmem:[#allocation4 + $0x28] sm:$0xff]
    %v120 = vld [vmem:[#allocation4 + $0x30] sm:$0xff]
    %v121 = vld [vmem:[#allocation4 + $0x38] sm:$0xff]
    %v122 = vld [vmem:[#allocation7] sm:$0xff]
    %v123 = vld [vmem:[#allocation7 + $0x8] sm:$0xff]
    %v124 = vld [vmem:[#allocation7 + $0x10] sm:$0xff]
    %v125 = vld [vmem:[#allocation7 + $0x18] sm:$0xff]
    %v126 = vld [vmem:[#allocation7 + $0x20] sm:$0xff]
    %v127 = vld [vmem:[#allocation7 + $0x28] sm:$0xff]
    %v128 = vld [vmem:[#allocation7 + $0x30] sm:$0xff]
    %v129 = vld [vmem:[#allocation7 + $0x38] sm:$0xff]
    %v130 = vld [vmem:[#allocation7 + $0x40] sm:$0xff]
    %v131 = vld [vmem:[#allocation7 + $0x48] sm:$0xff]
    %v132 = vld [vmem:[#allocation7 + $0x50] sm:$0xff]
    %v133 = vld [vmem:[#allocation7 + $0x58] sm:$0xff]
    %v134 = vld [vmem:[#allocation7 + $0x60] sm:$0xff]
    %v135 = vld [vmem:[#allocation7 + $0x68] sm:$0xff]
    %v136 = vld [vmem:[#allocation7 + $0x70] sm:$0xff]
    %v137 = vld [vmem:[#allocation7 + $0x78] sm:$0xff]
    %138 = vmatpush.msra.mxu0 %v137
    %139 = vmatpush.msra.mxu0 %v136
    %140 = vmatpush.msra.mxu0 %v135
    %141 = vmatpush.msra.mxu0 %v134
    %142 = vmatpush.msra.mxu0 %v133
    %143 = vmatpush.msra.mxu0 %v132
    %144 = vmatpush.msra.mxu0 %v131
    %145 = vmatpush.msra.mxu0 %v130
    %146 = vmatpush.msra.mxu0 %v129
    %147 = vmatpush.msra.mxu0 %v128
    %148 = vmatpush.msra.mxu0 %v127
    %149 = vmatpush.msra.mxu0 %v126
    %150 = vmatpush.msra.mxu0 %v125
    %151 = vmatpush.msra.mxu0 %v124
    %152 = vmatpush.msra.mxu0 %v123
    %153 = vmatpush.msra.mxu0 %v122
    %154 = vmatmul.f32.gmra.mxu0 %v114
    %v155 = vpop.f32.mrf.mxu0
    %v156 = vadd.f32 0.0, %v155
    %157 = vmatmul.f32.gmra.mxu0 %v115
    %v158 = vpop.f32.mrf.mxu0
    %v159 = vadd.f32 0.0, %v158
    %160 = vmatmul.f32.gmra.mxu0 %v116
    %v161 = vpop.f32.mrf.mxu0
    %v162 = vadd.f32 0.0, %v161
    %163 = vmatmul.f32.gmra.mxu0 %v117
    %v164 = vpop.f32.mrf.mxu0
    %v165 = vadd.f32 0.0, %v164
    %166 = vmatmul.f32.gmra.mxu0 %v118
    %v167 = vpop.f32.mrf.mxu0
    %v168 = vadd.f32 0.0, %v167
    %169 = vmatmul.f32.gmra.mxu0 %v119
    %v170 = vpop.f32.mrf.mxu0
    %v171 = vadd.f32 0.0, %v170
    %172 = vmatmul.f32.gmra.mxu0 %v120
    %v173 = vpop.f32.mrf.mxu0
    %v174 = vadd.f32 0.0, %v173
    %175 = vmatmul.f32.gmra.mxu0 %v121
    %v176 = vpop.f32.mrf.mxu0
    %v177 = vadd.f32 0.0, %v176
    %178 = vdwg.mxu0
    %v179 = vld [vmem:[%s2] sm:$0x1]
    %v181 = vperm.slane %v179, 0
    %v183 = vadd.f32 %v156, %v181
    %v184 = vadd.f32 %v159, %v181
    %v185 = vadd.f32 %v162, %v181
    %v186 = vadd.f32 %v165, %v181
    %v187 = vadd.f32 %v168, %v181
    %v188 = vadd.f32 %v171, %v181
    %v189 = vadd.f32 %v174, %v181
    %v190 = vadd.f32 %v177, %v181
    %191 = vst [vmem:[#allocation3] sm:$0xff] %v183
    %192 = vst [vmem:[#allocation3 + $0x8] sm:$0xff] %v184
    %193 = vst [vmem:[#allocation3 + $0x10] sm:$0xff] %v185
    %194 = vst [vmem:[#allocation3 + $0x18] sm:$0xff] %v186
    %195 = vst [vmem:[#allocation3 + $0x20] sm:$0xff] %v187
    %196 = vst [vmem:[#allocation3 + $0x28] sm:$0xff] %v188
    %197 = vst [vmem:[#allocation3 + $0x30] sm:$0xff] %v189
    %198 = vst [vmem:[#allocation3 + $0x38] sm:$0xff] %v190
    %v199 = vld [vmem:[#allocation9] sm:$0xff]
    %v200 = vld [vmem:[#allocation9 + $0x8] sm:$0xff]
    %v201 = vld [vmem:[#allocation9 + $0x10] sm:$0xff]
    %v202 = vld [vmem:[#allocation9 + $0x18] sm:$0xff]
    %v203 = vld [vmem:[#allocation9 + $0x20] sm:$0xff]
    %v204 = vld [vmem:[#allocation9 + $0x28] sm:$0xff]
    %v205 = vld [vmem:[#allocation9 + $0x30] sm:$0xff]
    %v206 = vld [vmem:[#allocation9 + $0x38] sm:$0xff]
    %v207 = vld [vmem:[#allocation9 + $0x40] sm:$0xff]
    %v208 = vld [vmem:[#allocation9 + $0x48] sm:$0xff]
    %v209 = vld [vmem:[#allocation9 + $0x50] sm:$0xff]
    %v210 = vld [vmem:[#allocation9 + $0x58] sm:$0xff]
    %v211 = vld [vmem:[#allocation9 + $0x60] sm:$0xff]
    %v212 = vld [vmem:[#allocation9 + $0x68] sm:$0xff]
    %v213 = vld [vmem:[#allocation9 + $0x70] sm:$0xff]
    %v214 = vld [vmem:[#allocation9 + $0x78] sm:$0xff]
    %v215 = vld [vmem:[#allocation10] sm:$0xff]
    %v216 = vld [vmem:[#allocation10 + $0x8] sm:$0xff]
    %v217 = vld [vmem:[#allocation10 + $0x10] sm:$0xff]
    %v218 = vld [vmem:[#allocation10 + $0x18] sm:$0xff]
    %v219 = vld [vmem:[#allocation10 + $0x20] sm:$0xff]
    %v220 = vld [vmem:[#allocation10 + $0x28] sm:$0xff]
    %v221 = vld [vmem:[#allocation10 + $0x30] sm:$0xff]
    %v222 = vld [vmem:[#allocation10 + $0x38] sm:$0xff]
    %v223 = vld [vmem:[#allocation10 + $0x40] sm:$0xff]
    %v224 = vld [vmem:[#allocation10 + $0x48] sm:$0xff]
    %v225 = vld [vmem:[#allocation10 + $0x50] sm:$0xff]
    %v226 = vld [vmem:[#allocation10 + $0x58] sm:$0xff]
    %v227 = vld [vmem:[#allocation10 + $0x60] sm:$0xff]
    %v228 = vld [vmem:[#allocation10 + $0x68] sm:$0xff]
    %v229 = vld [vmem:[#allocation10 + $0x70] sm:$0xff]
    %v230 = vld [vmem:[#allocation10 + $0x78] sm:$0xff]
    %v231 = vld [vmem:[#allocation10 + $0x80] sm:$0xff]
    %v232 = vld [vmem:[#allocation10 + $0x88] sm:$0xff]
    %v233 = vld [vmem:[#allocation10 + $0x90] sm:$0xff]
    %v234 = vld [vmem:[#allocation10 + $0x98] sm:$0xff]
    %v235 = vld [vmem:[#allocation10 + $0xa0] sm:$0xff]
    %v236 = vld [vmem:[#allocation10 + $0xa8] sm:$0xff]
    %v237 = vld [vmem:[#allocation10 + $0xb0] sm:$0xff]
    %v238 = vld [vmem:[#allocation10 + $0xb8] sm:$0xff]
    %v239 = vld [vmem:[#allocation10 + $0xc0] sm:$0xff]
    %v240 = vld [vmem:[#allocation10 + $0xc8] sm:$0xff]
    %v241 = vld [vmem:[#allocation10 + $0xd0] sm:$0xff]
    %v242 = vld [vmem:[#allocation10 + $0xd8] sm:$0xff]
    %v243 = vld [vmem:[#allocation10 + $0xe0] sm:$0xff]
    %v244 = vld [vmem:[#allocation10 + $0xe8] sm:$0xff]
    %v245 = vld [vmem:[#allocation10 + $0xf0] sm:$0xff]
    %v246 = vld [vmem:[#allocation10 + $0xf8] sm:$0xff]
    %v247 = vld [vmem:[%s5] sm:$0x1]
    %v249 = vperm.slane %v247, 0
    %v251 = vld [vmem:[#allocation2] sm:$0xff]
    %v252 = vld [vmem:[#allocation2 + $0x8] sm:$0xff]
    %v253 = vld [vmem:[#allocation3] sm:$0xff]
    %254 = vmatpush.msra.mxu0 %v214
    %255 = vmatpush.msra.mxu0 %v213
    %256 = vmatpush.msra.mxu0 %v212
    %257 = vmatpush.msra.mxu0 %v211
    %258 = vmatpush.msra.mxu0 %v210
    %259 = vmatpush.msra.mxu0 %v209
    %260 = vmatpush.msra.mxu0 %v208
    %261 = vmatpush.msra.mxu0 %v207
    %262 = vmatpush.msra.mxu0 %v206
    %263 = vmatpush.msra.mxu0 %v205
    %264 = vmatpush.msra.mxu0 %v204
    %265 = vmatpush.msra.mxu0 %v203
    %266 = vmatpush.msra.mxu0 %v202
    %267 = vmatpush.msra.mxu0 %v201
    %268 = vmatpush.msra.mxu0 %v200
    %269 = vmatpush.msra.mxu0 %v199
    %270 = vmatmul.f32.gmra.mxu0 %v251
    %v271 = vpop.f32.mrf.mxu0
    %v272 = vadd.f32 0.0, %v271
    %273 = vdwg.mxu0
    %v274 = vadd.f32 %v253, %v272
    %v275 = vtanh.pop %v274
    %276 = vmatpush.msra.mxu0 %v230
    %277 = vmatpush.msra.mxu0 %v229
    %278 = vmatpush.msra.mxu0 %v228
    %279 = vmatpush.msra.mxu0 %v227
    %280 = vmatpush.msra.mxu0 %v226
    %281 = vmatpush.msra.mxu0 %v225
    %282 = vmatpush.msra.mxu0 %v224
    %283 = vmatpush.msra.mxu0 %v223
    %284 = vmatpush.msra.mxu0 %v222
    %285 = vmatpush.msra.mxu0 %v221
    %286 = vmatpush.msra.mxu0 %v220
    %287 = vmatpush.msra.mxu0 %v219
    %288 = vmatpush.msra.mxu0 %v218
    %289 = vmatpush.msra.mxu0 %v217
    %290 = vmatpush.msra.mxu0 %v216
    %291 = vmatpush.msra.mxu0 %v215
    %292 = vmatmul.f32.gmra.mxu0 %v275
    %v293 = vpop.f32.mrf.mxu0
    %v294 = vadd.f32 %v249, %v293
    %295 = vdwg.mxu0
    %296 = vmatpush.msra.mxu0 %v246
    %297 = vmatpush.msra.mxu0 %v245
    %298 = vmatpush.msra.mxu0 %v244
    %299 = vmatpush.msra.mxu0 %v243
    %300 = vmatpush.msra.mxu0 %v242
    %301 = vmatpush.msra.mxu0 %v241
    %302 = vmatpush.msra.mxu0 %v240
    %303 = vmatpush.msra.mxu0 %v239
    %304 = vmatpush.msra.mxu0 %v238
    %305 = vmatpush.msra.mxu0 %v237
    %306 = vmatpush.msra.mxu0 %v236
    %307 = vmatpush.msra.mxu0 %v235
    %308 = vmatpush.msra.mxu0 %v234
    %309 = vmatpush.msra.mxu0 %v233
    %310 = vmatpush.msra.mxu0 %v232
    %311 = vmatpush.msra.mxu0 %v231
    %312 = vmatmul.f32.gmra.mxu0 %v252
    %v313 = vpop.f32.mrf.mxu0
    %v314 = vadd.f32 %v294, %v313
    %315 = vdwg.mxu0
    %v316 = vtanh.pop %v314
    %s317 = scalar_lea.vmem [#allocation3], 8
    %v318 = vld [vmem:[%s317] sm:$0xff]
    %319 = vmatpush.msra.mxu0 %v214
    %320 = vmatpush.msra.mxu0 %v213
    %321 = vmatpush.msra.mxu0 %v212
    %322 = vmatpush.msra.mxu0 %v211
    %323 = vmatpush.msra.mxu0 %v210
    %324 = vmatpush.msra.mxu0 %v209
    %325 = vmatpush.msra.mxu0 %v208
    %326 = vmatpush.msra.mxu0 %v207
    %327 = vmatpush.msra.mxu0 %v206
    %328 = vmatpush.msra.mxu0 %v205
    %329 = vmatpush.msra.mxu0 %v204
    %330 = vmatpush.msra.mxu0 %v203
    %331 = vmatpush.msra.mxu0 %v202
    %332 = vmatpush.msra.mxu0 %v201
    %333 = vmatpush.msra.mxu0 %v200
    %334 = vmatpush.msra.mxu0 %v199
    %335 = vmatmul.f32.gmra.mxu0 %v275
    %v336 = vpop.f32.mrf.mxu0
    %v337 = vadd.f32 0.0, %v336
    %338 = vdwg.mxu0
    %v339 = vadd.f32 %v318, %v337
    %v340 = vtanh.pop %v339
    %341 = vmatpush.msra.mxu0 %v230
    %342 = vmatpush.msra.mxu0 %v229
    %343 = vmatpush.msra.mxu0 %v228
    %344 = vmatpush.msra.mxu0 %v227
    %345 = vmatpush.msra.mxu0 %v226
    %346 = vmatpush.msra.mxu0 %v225
    %347 = vmatpush.msra.mxu0 %v224
    %348 = vmatpush.msra.mxu0 %v223
    %349 = vmatpush.msra.mxu0 %v222
    %350 = vmatpush.msra.mxu0 %v221
    %351 = vmatpush.msra.mxu0 %v220
    %352 = vmatpush.msra.mxu0 %v219
    %353 = vmatpush.msra.mxu0 %v218
    %354 = vmatpush.msra.mxu0 %v217
    %355 = vmatpush.msra.mxu0 %v216
    %356 = vmatpush.msra.mxu0 %v215
    %357 = vmatmul.f32.gmra.mxu0 %v340
    %v358 = vpop.f32.mrf.mxu0
    %v359 = vadd.f32 %v249, %v358
    %360 = vdwg.mxu0
    %361 = vmatpush.msra.mxu0 %v246
    %362 = vmatpush.msra.mxu0 %v245
    %363 = vmatpush.msra.mxu0 %v244
    %364 = vmatpush.msra.mxu0 %v243
    %365 = vmatpush.msra.mxu0 %v242
    %366 = vmatpush.msra.mxu0 %v241
    %367 = vmatpush.msra.mxu0 %v240
    %368 = vmatpush.msra.mxu0 %v239
    %369 = vmatpush.msra.mxu0 %v238
    %370 = vmatpush.msra.mxu0 %v237
    %371 = vmatpush.msra.mxu0 %v236
    %372 = vmatpush.msra.mxu0 %v235
    %373 = vmatpush.msra.mxu0 %v234
    %374 = vmatpush.msra.mxu0 %v233
    %375 = vmatpush.msra.mxu0 %v232
    %376 = vmatpush.msra.mxu0 %v231
    %377 = vmatmul.f32.gmra.mxu0 %v316
    %v378 = vpop.f32.mrf.mxu0
    %v379 = vadd.f32 %v359, %v378
    %380 = vdwg.mxu0
    %v381 = vtanh.pop %v379
    %s382 = scalar_lea.vmem [#allocation3], 16
    %v383 = vld [vmem:[%s382] sm:$0xff]
    %384 = vmatpush.msra.mxu0 %v214
    %385 = vmatpush.msra.mxu0 %v213
    %386 = vmatpush.msra.mxu0 %v212
    %387 = vmatpush.msra.mxu0 %v211
    %388 = vmatpush.msra.mxu0 %v210
    %389 = vmatpush.msra.mxu0 %v209
    %390 = vmatpush.msra.mxu0 %v208
    %391 = vmatpush.msra.mxu0 %v207
    %392 = vmatpush.msra.mxu0 %v206
    %393 = vmatpush.msra.mxu0 %v205
    %394 = vmatpush.msra.mxu0 %v204
    %395 = vmatpush.msra.mxu0 %v203
    %396 = vmatpush.msra.mxu0 %v202
    %397 = vmatpush.msra.mxu0 %v201
    %398 = vmatpush.msra.mxu0 %v200
    %399 = vmatpush.msra.mxu0 %v199
    %400 = vmatmul.f32.gmra.mxu0 %v340
    %v401 = vpop.f32.mrf.mxu0
    %v402 = vadd.f32 0.0, %v401
    %403 = vdwg.mxu0
    %v404 = vadd.f32 %v383, %v402
    %v405 = vtanh.pop %v404
    %406 = vmatpush.msra.mxu0 %v230
    %407 = vmatpush.msra.mxu0 %v229
    %408 = vmatpush.msra.mxu0 %v228
    %409 = vmatpush.msra.mxu0 %v227
    %410 = vmatpush.msra.mxu0 %v226
    %411 = vmatpush.msra.mxu0 %v225
    %412 = vmatpush.msra.mxu0 %v224
    %413 = vmatpush.msra.mxu0 %v223
    %414 = vmatpush.msra.mxu0 %v222
    %415 = vmatpush.msra.mxu0 %v221
    %416 = vmatpush.msra.mxu0 %v220
    %417 = vmatpush.msra.mxu0 %v219
    %418 = vmatpush.msra.mxu0 %v218
    %419 = vmatpush.msra.mxu0 %v217
    %420 = vmatpush.msra.mxu0 %v216
    %421 = vmatpush.msra.mxu0 %v215
    %422 = vmatmul.f32.gmra.mxu0 %v405
    %v423 = vpop.f32.mrf.mxu0
    %v424 = vadd.f32 %v249, %v423
    %425 = vdwg.mxu0
    %426 = vmatpush.msra.mxu0 %v246
    %427 = vmatpush.msra.mxu0 %v245
    %428 = vmatpush.msra.mxu0 %v244
    %429 = vmatpush.msra.mxu0 %v243
    %430 = vmatpush.msra.mxu0 %v242
    %431 = vmatpush.msra.mxu0 %v241
    %432 = vmatpush.msra.mxu0 %v240
    %433 = vmatpush.msra.mxu0 %v239
    %434 = vmatpush.msra.mxu0 %v238
    %435 = vmatpush.msra.mxu0 %v237
    %436 = vmatpush.msra.mxu0 %v236
    %437 = vmatpush.msra.mxu0 %v235
    %438 = vmatpush.msra.mxu0 %v234
    %439 = vmatpush.msra.mxu0 %v233
    %440 = vmatpush.msra.mxu0 %v232
    %441 = vmatpush.msra.mxu0 %v231
    %442 = vmatmul.f32.gmra.mxu0 %v381
    %v443 = vpop.f32.mrf.mxu0
    %v444 = vadd.f32 %v424, %v443
    %445 = vdwg.mxu0
    %v446 = vtanh.pop %v444
    %s447 = scalar_lea.vmem [#allocation3], 24
    %v448 = vld [vmem:[%s447] sm:$0xff]
    %449 = vmatpush.msra.mxu0 %v214
    %450 = vmatpush.msra.mxu0 %v213
    %451 = vmatpush.msra.mxu0 %v212
    %452 = vmatpush.msra.mxu0 %v211
    %453 = vmatpush.msra.mxu0 %v210
    %454 = vmatpush.msra.mxu0 %v209
    %455 = vmatpush.msra.mxu0 %v208
    %456 = vmatpush.msra.mxu0 %v207
    %457 = vmatpush.msra.mxu0 %v206
    %458 = vmatpush.msra.mxu0 %v205
    %459 = vmatpush.msra.mxu0 %v204
    %460 = vmatpush.msra.mxu0 %v203
    %461 = vmatpush.msra.mxu0 %v202
    %462 = vmatpush.msra.mxu0 %v201
    %463 = vmatpush.msra.mxu0 %v200
    %464 = vmatpush.msra.mxu0 %v199
    %465 = vmatmul.f32.gmra.mxu0 %v405
    %v466 = vpop.f32.mrf.mxu0
    %v467 = vadd.f32 0.0, %v466
    %468 = vdwg.mxu0
    %v469 = vadd.f32 %v448, %v467
    %v470 = vtanh.pop %v469
    %471 = vmatpush.msra.mxu0 %v230
    %472 = vmatpush.msra.mxu0 %v229
    %473 = vmatpush.msra.mxu0 %v228
    %474 = vmatpush.msra.mxu0 %v227
    %475 = vmatpush.msra.mxu0 %v226
    %476 = vmatpush.msra.mxu0 %v225
    %477 = vmatpush.msra.mxu0 %v224
    %478 = vmatpush.msra.mxu0 %v223
    %479 = vmatpush.msra.mxu0 %v222
    %480 = vmatpush.msra.mxu0 %v221
    %481 = vmatpush.msra.mxu0 %v220
    %482 = vmatpush.msra.mxu0 %v219
    %483 = vmatpush.msra.mxu0 %v218
    %484 = vmatpush.msra.mxu0 %v217
    %485 = vmatpush.msra.mxu0 %v216
    %486 = vmatpush.msra.mxu0 %v215
    %487 = vmatmul.f32.gmra.mxu0 %v470
    %v488 = vpop.f32.mrf.mxu0
    %v489 = vadd.f32 %v249, %v488
    %490 = vdwg.mxu0
    %491 = vmatpush.msra.mxu0 %v246
    %492 = vmatpush.msra.mxu0 %v245
    %493 = vmatpush.msra.mxu0 %v244
    %494 = vmatpush.msra.mxu0 %v243
    %495 = vmatpush.msra.mxu0 %v242
    %496 = vmatpush.msra.mxu0 %v241
    %497 = vmatpush.msra.mxu0 %v240
    %498 = vmatpush.msra.mxu0 %v239
    %499 = vmatpush.msra.mxu0 %v238
    %500 = vmatpush.msra.mxu0 %v237
    %501 = vmatpush.msra.mxu0 %v236
    %502 = vmatpush.msra.mxu0 %v235
    %503 = vmatpush.msra.mxu0 %v234
    %504 = vmatpush.msra.mxu0 %v233
    %505 = vmatpush.msra.mxu0 %v232
    %506 = vmatpush.msra.mxu0 %v231
    %507 = vmatmul.f32.gmra.mxu0 %v446
    %v508 = vpop.f32.mrf.mxu0
    %v509 = vadd.f32 %v489, %v508
    %510 = vdwg.mxu0
    %v511 = vtanh.pop %v509
    %s512 = scalar_lea.vmem [#allocation3], 32
    %v513 = vld [vmem:[%s512] sm:$0xff]
    %514 = vmatpush.msra.mxu0 %v214
    %515 = vmatpush.msra.mxu0 %v213
    %516 = vmatpush.msra.mxu0 %v212
    %517 = vmatpush.msra.mxu0 %v211
    %518 = vmatpush.msra.mxu0 %v210
    %519 = vmatpush.msra.mxu0 %v209
    %520 = vmatpush.msra.mxu0 %v208
    %521 = vmatpush.msra.mxu0 %v207
    %522 = vmatpush.msra.mxu0 %v206
    %523 = vmatpush.msra.mxu0 %v205
    %524 = vmatpush.msra.mxu0 %v204
    %525 = vmatpush.msra.mxu0 %v203
    %526 = vmatpush.msra.mxu0 %v202
    %527 = vmatpush.msra.mxu0 %v201
    %528 = vmatpush.msra.mxu0 %v200
    %529 = vmatpush.msra.mxu0 %v199
    %530 = vmatmul.f32.gmra.mxu0 %v470
    %v531 = vpop.f32.mrf.mxu0
    %v532 = vadd.f32 0.0, %v531
    %533 = vdwg.mxu0
    %v534 = vadd.f32 %v513, %v532
    %v535 = vtanh.pop %v534
    %536 = vmatpush.msra.mxu0 %v230
    %537 = vmatpush.msra.mxu0 %v229
    %538 = vmatpush.msra.mxu0 %v228
    %539 = vmatpush.msra.mxu0 %v227
    %540 = vmatpush.msra.mxu0 %v226
    %541 = vmatpush.msra.mxu0 %v225
    %542 = vmatpush.msra.mxu0 %v224
    %543 = vmatpush.msra.mxu0 %v223
    %544 = vmatpush.msra.mxu0 %v222
    %545 = vmatpush.msra.mxu0 %v221
    %546 = vmatpush.msra.mxu0 %v220
    %547 = vmatpush.msra.mxu0 %v219
    %548 = vmatpush.msra.mxu0 %v218
    %549 = vmatpush.msra.mxu0 %v217
    %550 = vmatpush.msra.mxu0 %v216
    %551 = vmatpush.msra.mxu0 %v215
    %552 = vmatmul.f32.gmra.mxu0 %v535
    %v553 = vpop.f32.mrf.mxu0
    %v554 = vadd.f32 %v249, %v553
    %555 = vdwg.mxu0
    %556 = vmatpush.msra.mxu0 %v246
    %557 = vmatpush.msra.mxu0 %v245
    %558 = vmatpush.msra.mxu0 %v244
    %559 = vmatpush.msra.mxu0 %v243
    %560 = vmatpush.msra.mxu0 %v242
    %561 = vmatpush.msra.mxu0 %v241
    %562 = vmatpush.msra.mxu0 %v240
    %563 = vmatpush.msra.mxu0 %v239
    %564 = vmatpush.msra.mxu0 %v238
    %565 = vmatpush.msra.mxu0 %v237
    %566 = vmatpush.msra.mxu0 %v236
    %567 = vmatpush.msra.mxu0 %v235
    %568 = vmatpush.msra.mxu0 %v234
    %569 = vmatpush.msra.mxu0 %v233
    %570 = vmatpush.msra.mxu0 %v232
    %571 = vmatpush.msra.mxu0 %v231
    %572 = vmatmul.f32.gmra.mxu0 %v511
    %v573 = vpop.f32.mrf.mxu0
    %v574 = vadd.f32 %v554, %v573
    %575 = vdwg.mxu0
    %v576 = vtanh.pop %v574
    %s577 = scalar_lea.vmem [#allocation3], 40
    %v578 = vld [vmem:[%s577] sm:$0xff]
    %579 = vmatpush.msra.mxu0 %v214
    %580 = vmatpush.msra.mxu0 %v213
    %581 = vmatpush.msra.mxu0 %v212
    %582 = vmatpush.msra.mxu0 %v211
    %583 = vmatpush.msra.mxu0 %v210
    %584 = vmatpush.msra.mxu0 %v209
    %585 = vmatpush.msra.mxu0 %v208
    %586 = vmatpush.msra.mxu0 %v207
    %587 = vmatpush.msra.mxu0 %v206
    %588 = vmatpush.msra.mxu0 %v205
    %589 = vmatpush.msra.mxu0 %v204
    %590 = vmatpush.msra.mxu0 %v203
    %591 = vmatpush.msra.mxu0 %v202
    %592 = vmatpush.msra.mxu0 %v201
    %593 = vmatpush.msra.mxu0 %v200
    %594 = vmatpush.msra.mxu0 %v199
    %595 = vmatmul.f32.gmra.mxu0 %v535
    %v596 = vpop.f32.mrf.mxu0
    %v597 = vadd.f32 0.0, %v596
    %598 = vdwg.mxu0
    %v599 = vadd.f32 %v578, %v597
    %v600 = vtanh.pop %v599
    %601 = vmatpush.msra.mxu0 %v230
    %602 = vmatpush.msra.mxu0 %v229
    %603 = vmatpush.msra.mxu0 %v228
    %604 = vmatpush.msra.mxu0 %v227
    %605 = vmatpush.msra.mxu0 %v226
    %606 = vmatpush.msra.mxu0 %v225
    %607 = vmatpush.msra.mxu0 %v224
    %608 = vmatpush.msra.mxu0 %v223
    %609 = vmatpush.msra.mxu0 %v222
    %610 = vmatpush.msra.mxu0 %v221
    %611 = vmatpush.msra.mxu0 %v220
    %612 = vmatpush.msra.mxu0 %v219
    %613 = vmatpush.msra.mxu0 %v218
    %614 = vmatpush.msra.mxu0 %v217
    %615 = vmatpush.msra.mxu0 %v216
    %616 = vmatpush.msra.mxu0 %v215
    %617 = vmatmul.f32.gmra.mxu0 %v600
    %v618 = vpop.f32.mrf.mxu0
    %v619 = vadd.f32 %v249, %v618
    %620 = vdwg.mxu0
    %621 = vmatpush.msra.mxu0 %v246
    %622 = vmatpush.msra.mxu0 %v245
    %623 = vmatpush.msra.mxu0 %v244
    %624 = vmatpush.msra.mxu0 %v243
    %625 = vmatpush.msra.mxu0 %v242
    %626 = vmatpush.msra.mxu0 %v241
    %627 = vmatpush.msra.mxu0 %v240
    %628 = vmatpush.msra.mxu0 %v239
    %629 = vmatpush.msra.mxu0 %v238
    %630 = vmatpush.msra.mxu0 %v237
    %631 = vmatpush.msra.mxu0 %v236
    %632 = vmatpush.msra.mxu0 %v235
    %633 = vmatpush.msra.mxu0 %v234
    %634 = vmatpush.msra.mxu0 %v233
    %635 = vmatpush.msra.mxu0 %v232
    %636 = vmatpush.msra.mxu0 %v231
    %637 = vmatmul.f32.gmra.mxu0 %v576
    %v638 = vpop.f32.mrf.mxu0
    %v639 = vadd.f32 %v619, %v638
    %640 = vdwg.mxu0
    %v641 = vtanh.pop %v639
    %s642 = scalar_lea.vmem [#allocation3], 48
    %v643 = vld [vmem:[%s642] sm:$0xff]
    %644 = vmatpush.msra.mxu0 %v214
    %645 = vmatpush.msra.mxu0 %v213
    %646 = vmatpush.msra.mxu0 %v212
    %647 = vmatpush.msra.mxu0 %v211
    %648 = vmatpush.msra.mxu0 %v210
    %649 = vmatpush.msra.mxu0 %v209
    %650 = vmatpush.msra.mxu0 %v208
    %651 = vmatpush.msra.mxu0 %v207
    %652 = vmatpush.msra.mxu0 %v206
    %653 = vmatpush.msra.mxu0 %v205
    %654 = vmatpush.msra.mxu0 %v204
    %655 = vmatpush.msra.mxu0 %v203
    %656 = vmatpush.msra.mxu0 %v202
    %657 = vmatpush.msra.mxu0 %v201
    %658 = vmatpush.msra.mxu0 %v200
    %659 = vmatpush.msra.mxu0 %v199
    %660 = vmatmul.f32.gmra.mxu0 %v600
    %v661 = vpop.f32.mrf.mxu0
    %v662 = vadd.f32 0.0, %v661
    %663 = vdwg.mxu0
    %v664 = vadd.f32 %v643, %v662
    %v665 = vtanh.pop %v664
    %666 = vmatpush.msra.mxu0 %v230
    %667 = vmatpush.msra.mxu0 %v229
    %668 = vmatpush.msra.mxu0 %v228
    %669 = vmatpush.msra.mxu0 %v227
    %670 = vmatpush.msra.mxu0 %v226
    %671 = vmatpush.msra.mxu0 %v225
    %672 = vmatpush.msra.mxu0 %v224
    %673 = vmatpush.msra.mxu0 %v223
    %674 = vmatpush.msra.mxu0 %v222
    %675 = vmatpush.msra.mxu0 %v221
    %676 = vmatpush.msra.mxu0 %v220
    %677 = vmatpush.msra.mxu0 %v219
    %678 = vmatpush.msra.mxu0 %v218
    %679 = vmatpush.msra.mxu0 %v217
    %680 = vmatpush.msra.mxu0 %v216
    %681 = vmatpush.msra.mxu0 %v215
    %682 = vmatmul.f32.gmra.mxu0 %v665
    %v683 = vpop.f32.mrf.mxu0
    %v684 = vadd.f32 %v249, %v683
    %685 = vdwg.mxu0
    %686 = vmatpush.msra.mxu0 %v246
    %687 = vmatpush.msra.mxu0 %v245
    %688 = vmatpush.msra.mxu0 %v244
    %689 = vmatpush.msra.mxu0 %v243
    %690 = vmatpush.msra.mxu0 %v242
    %691 = vmatpush.msra.mxu0 %v241
    %692 = vmatpush.msra.mxu0 %v240
    %693 = vmatpush.msra.mxu0 %v239
    %694 = vmatpush.msra.mxu0 %v238
    %695 = vmatpush.msra.mxu0 %v237
    %696 = vmatpush.msra.mxu0 %v236
    %697 = vmatpush.msra.mxu0 %v235
    %698 = vmatpush.msra.mxu0 %v234
    %699 = vmatpush.msra.mxu0 %v233
    %700 = vmatpush.msra.mxu0 %v232
    %701 = vmatpush.msra.mxu0 %v231
    %702 = vmatmul.f32.gmra.mxu0 %v641
    %v703 = vpop.f32.mrf.mxu0
    %v704 = vadd.f32 %v684, %v703
    %705 = vdwg.mxu0
    %v706 = vtanh.pop %v704
    %s707 = scalar_lea.vmem [#allocation3], 56
    %v708 = vld [vmem:[%s707] sm:$0xff]
    %709 = vmatpush.msra.mxu0 %v214
    %710 = vmatpush.msra.mxu0 %v213
    %711 = vmatpush.msra.mxu0 %v212
    %712 = vmatpush.msra.mxu0 %v211
    %713 = vmatpush.msra.mxu0 %v210
    %714 = vmatpush.msra.mxu0 %v209
    %715 = vmatpush.msra.mxu0 %v208
    %716 = vmatpush.msra.mxu0 %v207
    %717 = vmatpush.msra.mxu0 %v206
    %718 = vmatpush.msra.mxu0 %v205
    %719 = vmatpush.msra.mxu0 %v204
    %720 = vmatpush.msra.mxu0 %v203
    %721 = vmatpush.msra.mxu0 %v202
    %722 = vmatpush.msra.mxu0 %v201
    %723 = vmatpush.msra.mxu0 %v200
    %724 = vmatpush.msra.mxu0 %v199
    %725 = vmatmul.f32.gmra.mxu0 %v665
    %v726 = vpop.f32.mrf.mxu0
    %v727 = vadd.f32 0.0, %v726
    %728 = vdwg.mxu0
    %v729 = vadd.f32 %v708, %v727
    %v730 = vtanh.pop %v729
    %731 = vmatpush.msra.mxu0 %v230
    %732 = vmatpush.msra.mxu0 %v229
    %733 = vmatpush.msra.mxu0 %v228
    %734 = vmatpush.msra.mxu0 %v227
    %735 = vmatpush.msra.mxu0 %v226
    %736 = vmatpush.msra.mxu0 %v225
    %737 = vmatpush.msra.mxu0 %v224
    %738 = vmatpush.msra.mxu0 %v223
    %739 = vmatpush.msra.mxu0 %v222
    %740 = vmatpush.msra.mxu0 %v221
    %741 = vmatpush.msra.mxu0 %v220
    %742 = vmatpush.msra.mxu0 %v219
    %743 = vmatpush.msra.mxu0 %v218
    %744 = vmatpush.msra.mxu0 %v217
    %745 = vmatpush.msra.mxu0 %v216
    %746 = vmatpush.msra.mxu0 %v215
    %747 = vmatmul.f32.gmra.mxu0 %v730
    %v748 = vpop.f32.mrf.mxu0
    %v749 = vadd.f32 %v249, %v748
    %750 = vdwg.mxu0
    %751 = vmatpush.msra.mxu0 %v246
    %752 = vmatpush.msra.mxu0 %v245
    %753 = vmatpush.msra.mxu0 %v244
    %754 = vmatpush.msra.mxu0 %v243
    %755 = vmatpush.msra.mxu0 %v242
    %756 = vmatpush.msra.mxu0 %v241
    %757 = vmatpush.msra.mxu0 %v240
    %758 = vmatpush.msra.mxu0 %v239
    %759 = vmatpush.msra.mxu0 %v238
    %760 = vmatpush.msra.mxu0 %v237
    %761 = vmatpush.msra.mxu0 %v236
    %762 = vmatpush.msra.mxu0 %v235
    %763 = vmatpush.msra.mxu0 %v234
    %764 = vmatpush.msra.mxu0 %v233
    %765 = vmatpush.msra.mxu0 %v232
    %766 = vmatpush.msra.mxu0 %v231
    %767 = vmatmul.f32.gmra.mxu0 %v706
    %v768 = vpop.f32.mrf.mxu0
    %v769 = vadd.f32 %v749, %v768
    %770 = vdwg.mxu0
    %v771 = vtanh.pop %v769
    %772 = vst [vmem:[#allocation2] sm:$0xff] %v730
    %773 = vst [vmem:[#allocation2 + $0x8] sm:$0xff] %v771
    // Predicated region
    $region58: #{tpu_custom_call.1} parent=1 // pred_check
      %p774 = pneg %p108
    $region59: #{tpu_custom_call.1} parent=1 // pred_check_branch
      %776 = sbr.rel (%p774) target = $region61
    $region60: #{tpu_custom_call.1} parent=1 // pred_region
      %v777 = vld [vmem:[#allocation12] sm:$0xff]
      %v778 = vld [vmem:[#allocation12 + $0x8] sm:$0xff]
      %v779 = vld [vmem:[#allocation12 + $0x10] sm:$0xff]
      %v780 = vld [vmem:[#allocation12 + $0x18] sm:$0xff]
      %v781 = vld [vmem:[#allocation12 + $0x20] sm:$0xff]
      %v782 = vld [vmem:[#allocation12 + $0x28] sm:$0xff]
      %v783 = vld [vmem:[#allocation12 + $0x30] sm:$0xff]
      %v784 = vld [vmem:[#allocation12 + $0x38] sm:$0xff]
      %v785 = vld [vmem:[#allocation12 + $0x40] sm:$0xff]
      %v786 = vld [vmem:[#allocation12 + $0x48] sm:$0xff]
      %v787 = vld [vmem:[#allocation12 + $0x50] sm:$0xff]
      %v788 = vld [vmem:[#allocation12 + $0x58] sm:$0xff]
      %v789 = vld [vmem:[#allocation12 + $0x60] sm:$0xff]
      %v790 = vld [vmem:[#allocation12 + $0x68] sm:$0xff]
      %v791 = vld [vmem:[#allocation12 + $0x70] sm:$0xff]
      %v792 = vld [vmem:[#allocation12 + $0x78] sm:$0xff]
      %v793 = vld [vmem:[%s7] sm:$0x1]
      %v795 = vperm.slane %v793, 0
      %797 = vmatpush.msra.mxu0 %v792
      %798 = vmatpush.msra.mxu0 %v791
      %799 = vmatpush.msra.mxu0 %v790
      %800 = vmatpush.msra.mxu0 %v789
      %801 = vmatpush.msra.mxu0 %v788
      %802 = vmatpush.msra.mxu0 %v787
      %803 = vmatpush.msra.mxu0 %v786
      %804 = vmatpush.msra.mxu0 %v785
      %805 = vmatpush.msra.mxu0 %v784
      %806 = vmatpush.msra.mxu0 %v783
      %807 = vmatpush.msra.mxu0 %v782
      %808 = vmatpush.msra.mxu0 %v781
      %809 = vmatpush.msra.mxu0 %v780
      %810 = vmatpush.msra.mxu0 %v779
      %811 = vmatpush.msra.mxu0 %v778
      %812 = vmatpush.msra.mxu0 %v777
      %813 = vmatmul.f32.gmra.mxu0 %v771
      %v814 = vpop.f32.mrf.mxu0
      %v815 = vadd.f32 %v795, %v814
      %816 = vdwg.mxu0
      %817 = vst [vmem:[#allocation13] sm:$0xff] %v815
    $region61: #{tpu_custom_call.1} parent=1 // pred_fallthru
      _
    // Predicated region
    $region62: #{tpu_custom_call.1} parent=1 // pred_check
      _
    $region63: #{tpu_custom_call.1} parent=1 // pred_check_branch
      %819 = sbr.rel (0) target = $region65
    $region64: #{tpu_custom_call.1} parent=1 // pred_region
      %821 = vsyncadd [#allocation6], 0
      %s823 = sshll.u32 [#allocation13], 4
      %s824 = int_to_ptr.vmem [resolvable:$true] %s823
      %s825 = sshll.u32 %s8, 4
      %s826 = int_to_ptr.hbm [resolvable:$true] %s825
      %828 = dma.vmem_to_hbm [thread:$0]  %s824, 128, %s826, [#allocation6]
    $region65: #{tpu_custom_call.1} parent=1 // pred_fallthru
      _
    // Predicated region
    $region66: #{tpu_custom_call.1} parent=1 // pred_check
      _
    $region67: #{tpu_custom_call.1} parent=1 // pred_check_branch
      %830 = sbr.rel (0) target = $region69
    $region68: #{tpu_custom_call.1} parent=1 // pred_region
      %832 = dma.done [#allocation6], 128
    $region69: #{tpu_custom_call.1} parent=1 // pred_fallthru
      _
    %833 = vsyncpa [#allocation5], 1
    %834 = vsyncpa [#allocation8], 1
    %835 = vsyncpa [#allocation11], 1
    %836 = vsyncpa [#allocation6], 1

</llo_original>
